<compile_context>
chip_gen: v5e
topology: v5e:2x2
jax: 0.10.0
libtpu: 0.0.40
codegen_flags: <defaults>
</compile_context>

<pallas_src>
import functools

import jax
import jax.numpy as jnp
from jax import lax
from jax.experimental import pallas as pl
from jax.experimental.pallas import tpu as pltpu


# ----------------------------- Pallas kernel --------------------------------
def _gdl_kernel(mask_ref, pred_ref, targ_ref, out_ref, *, width, n_rows):
    """One grid step over `tb` flattened channel images of `hw_pad` lanes.

    mask_ref : VMEM (4, hw_pad) f32 0/1 masks [not_top, not_bottom, not_left, not_right]
    pred_ref : VMEM (tb, hw_pad) input dtype
    targ_ref : VMEM (tb, hw_pad) input dtype
    out_ref  : VMEM (1, 8, 128) f32 per-block per-lane partial sums
    """
    # Sobel conv is linear & bias-free: sobel(pred - target).
    d = pred_ref[...].astype(jnp.float32) - targ_ref[...].astype(jnp.float32)
    tb, hw_pad = d.shape

    # Partial tail block: rows past n_rows may hold garbage (possibly NaN/Inf)
    # from the boundary DMA — a select (not a multiply) keeps it out of the sum.
    # Rolls below are along lanes only, so rows never mix.
    if n_rows % tb != 0:
        row = lax.broadcasted_iota(jnp.int32, (tb, 1), 0)
        remaining = n_rows - pl.program_id(0) * tb
        d = jnp.where(row < remaining, d, 0.0)

    m = mask_ref[...]
    not_top, not_bot = m[0:1, :], m[1:2, :]
    # Hoisted sublane broadcasts: each is used twice below and JAX does not CSE
    # broadcast_in_dim, so materialize them once.
    not_left = jnp.broadcast_to(m[2:3, :], d.shape)
    not_right = jnp.broadcast_to(m[3:4, :], d.shape)

    # Flattened-index neighbor fetches with implicit zero padding
    # (roll semantics: y[j] = x[(j - shift) mod hw_pad]; wrapped / cross-row
    #  elements only ever land at masked (zero) positions).
    up = pltpu.roll(d, shift=width, axis=1) * not_top            # d[h-1, w]
    dn = pltpu.roll(d, shift=hw_pad - width, axis=1) * not_bot   # d[h+1, w]

    # Separable Sobel: vertical [1,2,1] smooth s, vertical derivative t.
    s = (up + dn) + (d + d)
    t = dn - up

    # sobel_x -> gx = s[w+1] - s[w-1] ; sobel_y -> gy = t[w+1] + 2 t[w] + t[w-1]
    right_s = pltpu.roll(s, shift=hw_pad - 1, axis=1) * not_right
    left_s = pltpu.roll(s, shift=1, axis=1) * not_left
    gx = right_s - left_s
    right_t = pltpu.roll(t, shift=hw_pad - 1, axis=1) * not_right
    left_t = pltpu.roll(t, shift=1, axis=1) * not_left
    gy = (right_t + left_t) + (t + t)

    contrib = jnp.abs(gx) + jnp.abs(gy)                          # (tb, hw_pad)

    # Per-lane partial reduction (VPU adds on the hot path, no full XLU reduce):
    #  1) fold sublane groups of 8 via a layout-free major-dim reshape + sum,
    #  2) fold 128-lane chunks with lane-aligned static slices.
    if tb % 8 == 0:
        red = jnp.sum(contrib.reshape(tb // 8, 8, hw_pad), axis=0)   # (8, hw_pad)
    else:
        # Tiny single-block case (tb == B*C, not a multiple of 8): spread the
        # column sums evenly over 8 rows (x0.125 keeps the total sum exact).
        red = jnp.broadcast_to(jnp.sum(contrib, axis=0, keepdims=True),
                               (8, hw_pad)) * 0.125
    part = red[:, 0:128]
    for c in range(1, hw_pad // 128):
        part = part + red[:, c * 128:(c + 1) * 128]
    out_ref[...] = part.reshape(1, 8, 128)


# ------------------------------ JAX glue -------------------------------------
def _round_down(x, m):
    return (x // m) * m


def _to_nchw(x):
    # Mirrors the module: permute if channels-last with <=4 channels.
    # TODO(synk): channels-last could be handled transpose-free by flattening to
    # (B, H*W*C) and rolling by C / C*W with channel-interleaved masks.
    if x.ndim == 4 and x.shape[-1] in (1, 2, 3, 4):
        x = jnp.transpose(x, (0, 3, 1, 2))
    return x


def _match_channels(pred, target):
    # Mirrors the RGB<->RGBA handling in the module.
    if pred.shape[1] != target.shape[1]:
        if pred.shape[1] == 3 and target.shape[1] == 4:
            R = target[:, 0:1]
            G = (target[:, 1:2] + target[:, 2:3]) / 2.0
            B = target[:, 3:4]
            target = jnp.concatenate([R, G, B], axis=1)
        elif pred.shape[1] == 4 and target.shape[1] == 3:
            R = target[:, 0:1]
            G = target[:, 1:2]
            B = target[:, 2:3]
            target = jnp.concatenate([R, G, G, B], axis=1)
    return target


def gradient_difference_loss(pred, target, *, block_images=None):
    pred = _to_nchw(pred)
    target = _to_nchw(target)
    target = _match_channels(pred, target)

    B, C, H, W = pred.shape
    bc = B * C
    hw = H * W
    # mean over (B,1,H,W) of (1/C) * sum_c (|gx| + |gy|)  ==  sum / (B*C*H*W)
    scale = 1.0 / float(B * C * H * W)

    # Lane-dense layout: one channel image per row of H*W lanes (free reshape
    # for contiguous NCHW). Inputs keep their native dtype; cast happens in-kernel.
    pred_f = pred.reshape(bc, hw)
    targ_f = target.reshape(bc, hw)

    # Keep the lane extent 128-aligned so the rolls stay ~1 XLU op per vreg.
    hw_pad = ((hw + 127) // 128) * 128
    if hw_pad != hw:
        # TODO(synk): avoid this extra HBM pass for non-128-multiple H*W by
        # tiling W-aligned lane chunks in-kernel instead of padding here.
        pred_f = jnp.pad(pred_f, ((0, 0), (0, hw_pad - hw)))
        targ_f = jnp.pad(targ_f, ((0, 0), (0, hw_pad - hw)))

    itemsize = jnp.dtype(pred_f.dtype).itemsize
    sub = 16 if itemsize < 4 else 8          # sublane packing granularity
    # ~3 MiB of f32 elements per block: amortizes per-step overhead while
    # keeping double-buffered inputs + live f32 temporaries well under the
    # 48 MiB scoped VMEM limit (safe on v5e/v6e and v7x's 64 MiB physical VMEM).
    max_elems = (3 << 20) // 4
    # TODO(synk): for very large single images (hw_pad >> max_elems) tile the
    # spatial axis with a 2-row halo instead of whole-image rows.
    if block_images is None:
        tb = max(sub, _round_down(max_elems // hw_pad, sub))
        # v7x megacore: keep >= 4 grid steps when there is enough work so the
        # "parallel" axis load-balances across both TensorCores.
        if bc >= 4 * sub:
            tb = min(tb, max(sub, _round_down(pl.cdiv(bc, 4), sub)))
    else:
        tb = int(block_images)
    if tb >= bc:
        tb = bc                              # single block: any row count is legal
    else:
        tb = max(sub, _round_down(tb, sub))  # tiled: sublane-aligned blocks
    grid0 = pl.cdiv(bc, tb)

    # 0/1 border masks, shared by every grid step (constant block index -> resident).
    # Masks are zero in the lane-pad region so padded lanes contribute nothing.
    idx = jnp.arange(hw_pad, dtype=jnp.int32)
    h_idx = idx // W
    w_idx = idx % W
    in_img = idx < hw
    masks = jnp.stack(
        [
            (h_idx > 0) & in_img,        # has a row above
            (h_idx < H - 1) & in_img,    # has a row below
            (w_idx > 0) & in_img,        # has a column to the left
            (w_idx < W - 1) & in_img,    # has a column to the right
        ],
        axis=0,
    ).astype(jnp.float32)                                       # (4, hw_pad)

    kernel = functools.partial(_gdl_kernel, width=W, n_rows=bc)
    partials = pl.pallas_call(
        kernel,
        out_shape=jax.ShapeDtypeStruct((grid0, 8, 128), jnp.float32),
        grid_spec=pltpu.PrefetchScalarGridSpec(
            num_scalar_prefetch=0,
            grid=(grid0,),
            in_specs=[
                pl.BlockSpec((4, hw_pad), lambda i: (0, 0)),
                pl.BlockSpec((tb, hw_pad), lambda i: (i, 0)),
                pl.BlockSpec((tb, hw_pad), lambda i: (i, 0)),
            ],
            out_specs=pl.BlockSpec((1, 8, 128), lambda i: (i, 0, 0)),
        ),
        compiler_params=pltpu.CompilerParams(
            dimension_semantics=("parallel",),
            vmem_limit_bytes=48 * 1024 * 1024,
        ),
    )(masks, pred_f, targ_f)

    return jnp.sum(partials) * scale


# ------------------------- pure-JAX reference --------------------------------
def reference_gdl(pred, target):
    pred = _to_nchw(pred).astype(jnp.float32)
    target = _to_nchw(target).astype(jnp.float32)
    target = _match_channels(pred, target)

    sobel_x = jnp.array([[-1, 0, 1], [-2, 0, 2], [-1, 0, 1]],
                        jnp.float32).reshape(1, 1, 3, 3)
    sobel_y = jnp.array([[-1, -2, -1], [0, 0, 0], [1, 2, 1]],
                        jnp.float32).reshape(1, 1, 3, 3)

    def conv(x, w):
        return lax.conv_general_dilated(
            x, w, window_strides=(1, 1), padding=((1, 1), (1, 1)),
            dimension_numbers=("NCHW", "OIHW", "NCHW"))

    C = pred.shape[1]
    gdx = 0.0
    gdy = 0.0
    for c in range(C):
        pc = pred[:, c:c + 1]
        tc = target[:, c:c + 1]
        gdx = gdx + jnp.abs(conv(pc, sobel_x) - conv(tc, sobel_x))
        gdy = gdy + jnp.abs(conv(pc, sobel_y) - conv(tc, sobel_y))
    return jnp.mean(gdx / C + gdy / C)


if __name__ == "__main__":
    key = jax.random.PRNGKey(0)
    ks = jax.random.split(key, 8)

    # Case 1: NCHW inputs, matching channel counts (single full block).
    p1 = jax.random.normal(ks[0], (2, 4, 16, 16), dtype=jnp.float32)
    t1 = jax.random.normal(ks[1], (2, 4, 16, 16), dtype=jnp.float32)
    o1 = jax.block_until_ready(gradient_difference_loss(p1, t1))
    r1 = jax.block_until_ready(reference_gdl(p1, t1))
    assert jnp.allclose(o1, r1, rtol=2e-4, atol=1e-5), (o1, r1)

    # Case 2: channels-last RGB pred vs RGBA target (permute + channel matching,
    # B*C = 6 not a multiple of 8 -> small single-block reduction path).
    p2 = jax.random.normal(ks[2], (2, 16, 16, 3), dtype=jnp.float32)
    t2 = jax.random.normal(ks[3], (2, 16, 16, 4), dtype=jnp.float32)
    o2 = jax.block_until_ready(gradient_difference_loss(p2, t2))
    r2 = jax.block_until_ready(reference_gdl(p2, t2))
    assert jnp.allclose(o2, r2, rtol=2e-4, atol=1e-5), (o2, r2)

    # Case 3: multi-step grid with a partial tail block (in-kernel row masking).
    p3 = jax.random.normal(ks[4], (3, 4, 16, 16), dtype=jnp.float32)
    t3 = jax.random.normal(ks[5], (3, 4, 16, 16), dtype=jnp.float32)
    o3 = jax.block_until_ready(gradient_difference_loss(p3, t3, block_images=8))
    r3 = jax.block_until_ready(reference_gdl(p3, t3))
    assert jnp.allclose(o3, r3, rtol=2e-4, atol=1e-5), (o3, r3)

    # Case 4: H*W not a multiple of 128 (lane-padding + masked-wrap path).
    p4 = jax.random.normal(ks[6], (2, 4, 12, 12), dtype=jnp.float32)
    t4 = jax.random.normal(ks[7], (2, 4, 12, 12), dtype=jnp.float32)
    o4 = jax.block_until_ready(gradient_difference_loss(p4, t4))
    r4 = jax.block_until_ready(reference_gdl(p4, t4))
    assert jnp.allclose(o4, r4, rtol=2e-4, atol=1e-5), (o4, r4)

    print("KERNEL_OK")
</pallas_src>

<mosaic_0001>
module attributes {stable_mosaic.version = 11 : i64} {
  func.func @_gdl_kernel(%arg0: i32, %arg1: memref<4x256xf32, #tpu.memory_space<vmem>>, %arg2: memref<8x256xf32, #tpu.memory_space<vmem>>, %arg3: memref<8x256xf32, #tpu.memory_space<vmem>>, %arg4: memref<1x8x128xf32, #tpu.memory_space<vmem>>) attributes {dimension_semantics = [#tpu.dimension_semantics<parallel>], iteration_bounds = array<i64: 1>, scalar_prefetch = 0 : i64, scratch_operands = 0 : i64, tpu.core_type = #tpu.core_type<tc>, window_params = [{pipeline_mode = #tpu.pipeline_mode<synchronous>, transform_indices = @transform_0, window_bounds = array<i64: 4, 256>}, {transform_indices = @transform_1, window_bounds = array<i64: 8, 256>}, {transform_indices = @transform_2, window_bounds = array<i64: 8, 256>}, {transform_indices = @transform_3, window_bounds = array<i64: 1, 8, 128>}]} {
    %c0 = arith.constant 0 : index
    %c0_0 = arith.constant 0 : index
    %0 = vector.load %arg2[%c0, %c0_0] : memref<8x256xf32, #tpu.memory_space<vmem>>, vector<8x256xf32>
    %c0_1 = arith.constant 0 : index
    %c0_2 = arith.constant 0 : index
    %1 = vector.load %arg3[%c0_1, %c0_2] : memref<8x256xf32, #tpu.memory_space<vmem>>, vector<8x256xf32>
    %2 = arith.subf %0, %1 : vector<8x256xf32>
    %c0_3 = arith.constant 0 : index
    %c0_4 = arith.constant 0 : index
    %3 = vector.load %arg1[%c0_3, %c0_4] : memref<4x256xf32, #tpu.memory_space<vmem>>, vector<4x256xf32>
    %4 = vector.extract_strided_slice %3 {offsets = [0, 0], sizes = [1, 256], strides = [1, 1]} : vector<4x256xf32> to vector<1x256xf32>
    %5 = vector.extract_strided_slice %3 {offsets = [1, 0], sizes = [1, 256], strides = [1, 1]} : vector<4x256xf32> to vector<1x256xf32>
    %6 = vector.extract_strided_slice %3 {offsets = [2, 0], sizes = [1, 256], strides = [1, 1]} : vector<4x256xf32> to vector<1x256xf32>
    %7 = vector.shape_cast %6 : vector<1x256xf32> to vector<1x256xf32>
    %8 = vector.broadcast %7 : vector<1x256xf32> to vector<8x256xf32>
    %9 = vector.extract_strided_slice %3 {offsets = [3, 0], sizes = [1, 256], strides = [1, 1]} : vector<4x256xf32> to vector<1x256xf32>
    %10 = vector.shape_cast %9 : vector<1x256xf32> to vector<1x256xf32>
    %11 = vector.broadcast %10 : vector<1x256xf32> to vector<8x256xf32>
    %c16_i32 = arith.constant 16 : i32
    %12 = tpu.dynamic_rotate %2 by %c16_i32 dim 1 : vector<8x256xf32>, i32 -> vector<8x256xf32>
    %13 = vector.broadcast %4 : vector<1x256xf32> to vector<8x256xf32>
    %14 = arith.mulf %12, %13 : vector<8x256xf32>
    %c240_i32 = arith.constant 240 : i32
    %15 = tpu.dynamic_rotate %2 by %c240_i32 dim 1 : vector<8x256xf32>, i32 -> vector<8x256xf32>
    %16 = vector.broadcast %5 : vector<1x256xf32> to vector<8x256xf32>
    %17 = arith.mulf %15, %16 : vector<8x256xf32>
    %18 = arith.addf %14, %17 : vector<8x256xf32>
    %19 = arith.addf %2, %2 : vector<8x256xf32>
    %20 = arith.addf %18, %19 : vector<8x256xf32>
    %21 = arith.subf %17, %14 : vector<8x256xf32>
    %c255_i32 = arith.constant 255 : i32
    %22 = tpu.dynamic_rotate %20 by %c255_i32 dim 1 : vector<8x256xf32>, i32 -> vector<8x256xf32>
    %23 = arith.mulf %22, %11 : vector<8x256xf32>
    %c1_i32 = arith.constant 1 : i32
    %24 = tpu.dynamic_rotate %20 by %c1_i32 dim 1 : vector<8x256xf32>, i32 -> vector<8x256xf32>
    %25 = arith.mulf %24, %8 : vector<8x256xf32>
    %26 = arith.subf %23, %25 : vector<8x256xf32>
    %c255_i32_5 = arith.constant 255 : i32
    %27 = tpu.dynamic_rotate %21 by %c255_i32_5 dim 1 : vector<8x256xf32>, i32 -> vector<8x256xf32>
    %28 = arith.mulf %27, %11 : vector<8x256xf32>
    %c1_i32_6 = arith.constant 1 : i32
    %29 = tpu.dynamic_rotate %21 by %c1_i32_6 dim 1 : vector<8x256xf32>, i32 -> vector<8x256xf32>
    %30 = arith.mulf %29, %8 : vector<8x256xf32>
    %31 = arith.addf %28, %30 : vector<8x256xf32>
    %32 = arith.addf %21, %21 : vector<8x256xf32>
    %33 = arith.addf %31, %32 : vector<8x256xf32>
    %34 = math.absf %26 : vector<8x256xf32>
    %35 = math.absf %33 : vector<8x256xf32>
    %36 = arith.addf %34, %35 : vector<8x256xf32>
    %37 = vector.shape_cast %36 : vector<8x256xf32> to vector<1x8x256xf32>
    %cst = arith.constant dense<0.000000e+00> : vector<8x256xf32>
    %38 = vector.multi_reduction <add>, %37, %cst [0] : vector<1x8x256xf32> to vector<8x256xf32>
    %39 = vector.extract_strided_slice %38 {offsets = [0, 0], sizes = [8, 128], strides = [1, 1]} : vector<8x256xf32> to vector<8x128xf32>
    %40 = vector.extract_strided_slice %38 {offsets = [0, 128], sizes = [8, 128], strides = [1, 1]} : vector<8x256xf32> to vector<8x128xf32>
    %41 = arith.addf %39, %40 : vector<8x128xf32>
    %42 = vector.shape_cast %41 : vector<8x128xf32> to vector<1x8x128xf32>
    %c0_7 = arith.constant 0 : index
    %c0_8 = arith.constant 0 : index
    %c0_9 = arith.constant 0 : index
    %43 = vector.load %arg4[%c0_7, %c0_8, %c0_9] : memref<1x8x128xf32, #tpu.memory_space<vmem>>, vector<1x8x128xf32>
    tpu.vector_store %arg4[%c0_7, %c0_8, %c0_9], %42 {strides = array<i32>} : memref<1x8x128xf32, #tpu.memory_space<vmem>>, vector<1x8x128xf32>,
    return
  }
  func.func @transform_0(%arg0: i32) -> (i32, i32) {
    %c0_i32 = arith.constant 0 : i32
    %c0_i32_0 = arith.constant 0 : i32
    %c0_i32_1 = arith.constant 0 : i32
    return %c0_i32, %c0_i32_0 : i32, i32
  }
  func.func @transform_1(%arg0: i32) -> (i32, i32) {
    %c0_i32 = arith.constant 0 : i32
    %c0_i32_0 = arith.constant 0 : i32
    return %arg0, %c0_i32 : i32, i32
  }
  func.func @transform_2(%arg0: i32) -> (i32, i32) {
    %c0_i32 = arith.constant 0 : i32
    %c0_i32_0 = arith.constant 0 : i32
    return %arg0, %c0_i32 : i32, i32
  }
  func.func @transform_3(%arg0: i32) -> (i32, i32, i32) {
    %c0_i32 = arith.constant 0 : i32
    %c0_i32_0 = arith.constant 0 : i32
    %c0_i32_1 = arith.constant 0 : i32
    return %arg0, %c0_i32, %c0_i32_0 : i32, i32, i32
  }
}

</mosaic_0001>

<llo_original>
// kernel: tpu_custom_call.1
$region0: #{tpu_custom_call.1}
  #allocation0 [shape = 'u32[]', space=smem, size = 0x4, offset = 0x4, fixed_abs, tag = 'smem constant byte address 0x4 - core index']
  #allocation1 [shape = 'u32[72,128]{1,0:T(1,128)}', space=vmem, size = 0x9000, scoped, tag = 'internal scratch']
  %s0 = inlined_call_operand.hbm [shape: f32[4,256], index: 0, kind: input, shape index: {}]
  %s1 = inlined_call_operand.hbm [shape: f32[8,256], index: 1, kind: input, shape index: {}]
  %s2 = inlined_call_operand.hbm [shape: f32[8,256], index: 2, kind: input, shape index: {}]
  %s3 = inlined_call_operand.hbm [shape: f32[1,8,128], index: 3, kind: output, shape index: {}]
  %s4 = sld [smem:[#allocation0]]
  $region34: #{tpu_custom_call.1} parent=0
    _
  %s6 = ssub.s32 1, %s4
  %s7 = scalar_select 0, %s6, %s4
  $region1: #{tpu_custom_call.1} parent=0
    #allocation2 [shape = 'u8[4096]{0}', space=vmem, size = 0x1000, scoped, tag = 'input window, operand 0, single buffered']
    #allocation3 [shape = 's32[1]{0}', space=sflag, size = 0x4, scoped, tag = 'scoped memory for tpu_custom_call.1']
    #allocation4 [shape = 's32[1]{0}', space=sflag, size = 0x4, scoped, tag = 'scoped memory for tpu_custom_call.1']
    #allocation5 [shape = 'u8[8192]{0}', space=vmem, size = 0x2000, scoped, tag = 'input window, operand 1, single buffered']
    #allocation6 [shape = 's32[1]{0}', space=sflag, size = 0x4, scoped, tag = 'scoped memory for tpu_custom_call.1']
    #allocation7 [shape = 'u8[8192]{0}', space=vmem, size = 0x2000, scoped, tag = 'input window, operand 2, single buffered']
    #allocation8 [shape = 'u8[4096]{0}', space=vmem, size = 0x1000, scoped, tag = 'output window, operand 0, single buffered']
    %8 = vsyncpa [#allocation3], 0
    %9 = vsyncpa [#allocation6], 0
    %10 = vsyncpa [#allocation4], 0
    // Predicated region
    $region2: #{tpu_custom_call.1} parent=1 // pred_check
      _
    $region3: #{tpu_custom_call.1} parent=1 // pred_check_branch
      %12 = sbr.rel (0) target = $region5
    $region4: #{tpu_custom_call.1} parent=1 // pred_region
      %14 = vsyncadd [#allocation3], 0
      %s16 = sshll.u32 %s0, 4
      %s17 = int_to_ptr.hbm [resolvable:$true] %s16
      %s18 = sshll.u32 [#allocation2], 4
      %s19 = int_to_ptr.vmem [resolvable:$true] %s18
      %21 = dma.hbm_to_vmem [thread:$0]  %s17, 128, %s19, [#allocation3]
    $region5: #{tpu_custom_call.1} parent=1 // pred_fallthru
      _
    // Predicated region
    $region6: #{tpu_custom_call.1} parent=1 // pred_check
      _
    $region7: #{tpu_custom_call.1} parent=1 // pred_check_branch
      %23 = sbr.rel (0) target = $region9
    $region8: #{tpu_custom_call.1} parent=1 // pred_region
      %25 = vsyncadd [#allocation6], 0
      %s27 = sshll.u32 %s1, 4
      %s28 = int_to_ptr.hbm [resolvable:$true] %s27
      %s29 = sshll.u32 [#allocation5], 4
      %s30 = int_to_ptr.vmem [resolvable:$true] %s29
      %32 = dma.hbm_to_vmem [thread:$0]  %s28, 256, %s30, [#allocation6]
    $region9: #{tpu_custom_call.1} parent=1 // pred_fallthru
      _
    // Predicated region
    $region10: #{tpu_custom_call.1} parent=1 // pred_check
      _
    $region11: #{tpu_custom_call.1} parent=1 // pred_check_branch
      %34 = sbr.rel (0) target = $region13
    $region12: #{tpu_custom_call.1} parent=1 // pred_region
      %36 = vsyncadd [#allocation6], 0
      %s38 = sshll.u32 %s2, 4
      %s39 = int_to_ptr.hbm [resolvable:$true] %s38
      %s40 = sshll.u32 [#allocation7], 4
      %s41 = int_to_ptr.vmem [resolvable:$true] %s40
      %43 = dma.hbm_to_vmem [thread:$0]  %s39, 256, %s41, [#allocation6]
    $region13: #{tpu_custom_call.1} parent=1 // pred_fallthru
      _
    // Predicated region
    $region14: #{tpu_custom_call.1} parent=1 // pred_check
      _
    $region15: #{tpu_custom_call.1} parent=1 // pred_check_branch
      %45 = sbr.rel (0) target = $region17
    $region16: #{tpu_custom_call.1} parent=1 // pred_region
      %47 = dma.done [#allocation3], 128
    $region17: #{tpu_custom_call.1} parent=1 // pred_fallthru
      _
    // Predicated region
    $region18: #{tpu_custom_call.1} parent=1 // pred_check
      _
    $region19: #{tpu_custom_call.1} parent=1 // pred_check_branch
      %49 = sbr.rel (0) target = $region21
    $region20: #{tpu_custom_call.1} parent=1 // pred_region
      %51 = dma.done [#allocation6], 256
    $region21: #{tpu_custom_call.1} parent=1 // pred_fallthru
      _
    // Predicated region
    $region22: #{tpu_custom_call.1} parent=1 // pred_check
      _
    $region23: #{tpu_custom_call.1} parent=1 // pred_check_branch
      %53 = sbr.rel (0) target = $region25
    $region24: #{tpu_custom_call.1} parent=1 // pred_region
      %55 = dma.done [#allocation6], 256
    $region25: #{tpu_custom_call.1} parent=1 // pred_fallthru
      _
    %v56 = vld [vmem:[#allocation5] sm:$0xff]
    %v57 = vld [vmem:[#allocation5 + $0x8] sm:$0xff]
    %v58 = vld [vmem:[#allocation7] sm:$0xff]
    %v59 = vld [vmem:[#allocation7 + $0x8] sm:$0xff]
    %v60 = vsub.f32 %v56, %v58
    %v61 = vsub.f32 %v57, %v59
    %v62 = vld [vmem:[#allocation2] sm:$0xff]
    %v64 = vperm.slane %v62, 2
    %v65 = vperm.slane %v62, 6
    %v68 = vperm.slane %v64, 2
    %v69 = vperm.slane %v65, 2
    %v70 = vperm.slane %v62, 3
    %v71 = vperm.slane %v62, 7
    %v74 = vperm.slane %v70, 3
    %v75 = vperm.slane %v71, 3
    %76 = vrot.lane.b32.xlu0 %v60, 16
    %v77 = vpop.permute.xlu0 %76
    %78 = vrot.lane.b32.xlu0 %v61, 16
    %v79 = vpop.permute.xlu0 %78
    %v80 = vlaneseq
    %v81 = vand.u32 %v80, 127
    %vm82 = vcmp.lt.s32.totalorder %v81, 16
    %v83 = vsel %vm82, %v77, %v79
    %v84 = vsel %vm82, %v79, %v77
    %v85 = vperm.slane %v62, 0
    %v86 = vperm.slane %v62, 4
    %v89 = vperm.slane %v85, 0
    %v90 = vperm.slane %v86, 0
    %v91 = vmul.f32 %v84, %v89
    %v92 = vmul.f32 %v83, %v90
    %93 = vrot.lane.b32.xlu0 %v60, 112
    %v94 = vpop.permute.xlu0 %93
    %95 = vrot.lane.b32.xlu0 %v61, 112
    %v96 = vpop.permute.xlu0 %95
    %vm97 = vcmp.lt.s32.totalorder %v81, 112
    %v98 = vsel %vm97, %v94, %v96
    %v99 = vsel %vm97, %v96, %v94
    %v100 = vperm.slane %v62, 1
    %v101 = vperm.slane %v62, 5
    %v104 = vperm.slane %v100, 1
    %v105 = vperm.slane %v101, 1
    %v106 = vmul.f32 %v98, %v104
    %v107 = vmul.f32 %v99, %v105
    %v108 = vadd.f32 %v91, %v106
    %v109 = vadd.f32 %v92, %v107
    %v110 = vadd.f32 %v60, %v60
    %v111 = vadd.f32 %v61, %v61
    %v112 = vadd.f32 %v108, %v110
    %v113 = vadd.f32 %v109, %v111
    %v114 = vsub.f32 %v106, %v91
    %v115 = vsub.f32 %v107, %v92
    %116 = vrot.lane.b32.xlu0 %v112, 127
    %v117 = vpop.permute.xlu0 %116
    %118 = vrot.lane.b32.xlu0 %v113, 127
    %v119 = vpop.permute.xlu0 %118
    %vm120 = vcmp.lt.s32.totalorder %v81, 127
    %v121 = vsel %vm120, %v117, %v119
    %v122 = vsel %vm120, %v119, %v117
    %v123 = vmul.f32 %v121, %v74
    %v124 = vmul.f32 %v122, %v75
    %125 = vrot.lane.b32.xlu0 %v112, 1
    %v126 = vpop.permute.xlu0 %125
    %127 = vrot.lane.b32.xlu0 %v113, 1
    %v128 = vpop.permute.xlu0 %127
    %vm129 = vcmp.lt.s32.totalorder %v81, 1
    %v130 = vsel %vm129, %v126, %v128
    %v131 = vsel %vm129, %v128, %v126
    %v132 = vmul.f32 %v131, %v68
    %v133 = vmul.f32 %v130, %v69
    %v134 = vsub.f32 %v123, %v132
    %v135 = vsub.f32 %v124, %v133
    %136 = vrot.lane.b32.xlu0 %v114, 127
    %v137 = vpop.permute.xlu0 %136
    %138 = vrot.lane.b32.xlu0 %v115, 127
    %v139 = vpop.permute.xlu0 %138
    %v140 = vsel %vm120, %v137, %v139
    %v141 = vsel %vm120, %v139, %v137
    %v142 = vmul.f32 %v140, %v74
    %v143 = vmul.f32 %v141, %v75
    %144 = vrot.lane.b32.xlu0 %v114, 1
    %v145 = vpop.permute.xlu0 %144
    %146 = vrot.lane.b32.xlu0 %v115, 1
    %v147 = vpop.permute.xlu0 %146
    %v148 = vsel %vm129, %v145, %v147
    %v149 = vsel %vm129, %v147, %v145
    %v150 = vmul.f32 %v149, %v68
    %v151 = vmul.f32 %v148, %v69
    %v152 = vadd.f32 %v142, %v150
    %v153 = vadd.f32 %v143, %v151
    %v154 = vadd.f32 %v114, %v114
    %v155 = vadd.f32 %v115, %v115
    %v156 = vadd.f32 %v152, %v154
    %v157 = vadd.f32 %v153, %v155
    %v158 = vand.u32 2147483647, %v134
    %v159 = vand.u32 2147483647, %v135
    %v160 = vand.u32 2147483647, %v156
    %v161 = vand.u32 2147483647, %v157
    %v162 = vadd.f32 %v158, %v160
    %v163 = vadd.f32 %v159, %v161
    %v164 = vadd.f32 %v162, 0.0
    %v165 = vadd.f32 %v163, 0.0
    %v166 = vadd.f32 %v164, %v165
    %167 = vst [vmem:[#allocation8] sm:$0xff] %v166
    // Predicated region
    $region26: #{tpu_custom_call.1} parent=1 // pred_check
      _
    $region27: #{tpu_custom_call.1} parent=1 // pred_check_branch
      %169 = sbr.rel (0) target = $region29
    $region28: #{tpu_custom_call.1} parent=1 // pred_region
      %171 = vsyncadd [#allocation4], 0
      %s173 = sshll.u32 [#allocation8], 4
      %s174 = int_to_ptr.vmem [resolvable:$true] %s173
      %s175 = sshll.u32 %s3, 4
      %s176 = int_to_ptr.hbm [resolvable:$true] %s175
      %178 = dma.vmem_to_hbm [thread:$0]  %s174, 128, %s176, [#allocation4]
    $region29: #{tpu_custom_call.1} parent=1 // pred_fallthru
      _
    // Predicated region
    $region30: #{tpu_custom_call.1} parent=1 // pred_check
      _
    $region31: #{tpu_custom_call.1} parent=1 // pred_check_branch
      %180 = sbr.rel (0) target = $region33
    $region32: #{tpu_custom_call.1} parent=1 // pred_region
      %182 = dma.done [#allocation4], 128
    $region33: #{tpu_custom_call.1} parent=1 // pred_fallthru
      _
    %183 = vsyncpa [#allocation3], 1
    %184 = vsyncpa [#allocation6], 1
    %185 = vsyncpa [#allocation4], 1

</llo_original>
